<compile_context>
chip_gen: v5e
topology: v5e:2x2
jax: 0.10.0
libtpu: 0.0.40
codegen_flags: <defaults>
</compile_context>

<pallas_src>
import functools

import jax
import jax.numpy as jnp
from jax.experimental import pallas as pl
from jax.experimental.pallas import tpu as pltpu

INPUT_DIM = 4
HIDDEN_DIM = 16
NUM_CLASSES = 3
SPARSITY = 0.3

_LANE_MULT = 512       # multiple of 128 (layout), 256 (v6e/v7x MXU N), 512 (v5e 4x128 MXUs)
_MAX_TB = 131072       # ~128 B/lane of VMEM (double-buffered x + out) -> ~16.8 MiB, v7x-safe
_MIN_SPLIT_B = 2048    # below this a 2nd tile (for v7x's 2nd TensorCore) costs more than it saves


def feedforward_kernel(x_ref, w1_ref, b1_ref, w2_ref, b2_ref, w3_ref, b3_ref, o_ref):
    # x_ref: (INPUT_DIM, TB) -- batch on the lane axis.
    x = x_ref[...]
    # Layer 1: Linear(4 -> 16) + ReLU            => (16, TB)
    h1 = jnp.dot(w1_ref[...], x, preferred_element_type=jnp.float32)
    h1 = jnp.maximum(h1 + b1_ref[...], 0.0)
    # Layer 2: Linear(16 -> 16) + ReLU           => (16, TB)
    h2 = jnp.dot(w2_ref[...], h1, preferred_element_type=jnp.float32)
    h2 = jnp.maximum(h2 + b2_ref[...], 0.0)
    # Layer 3: Linear(16 -> 3) + Identity        => (3, TB), lane-dense store
    out = jnp.dot(w3_ref[...], h2, preferred_element_type=jnp.float32) + b3_ref[...]
    o_ref[...] = out.astype(o_ref.dtype)


def _round_up(x, m):
    return ((x + m - 1) // m) * m


def _cdiv(a, b):
    return -(-a // b)


def _choose_tile(batch, block_batch):
    """Pick a lane tile (multiple of 128, ideally 512) and padded batch.

    Minimizes padding for large batches, respects a user tile cap, caps VMEM use,
    and (for v7x) prefers >=2 tiles on mid/large batches so both TensorCores work.
    """
    cap = max(128, (min(block_batch, _MAX_TB) // 128) * 128)   # force 128-alignment of user cap
    lane_mult = _LANE_MULT if cap % _LANE_MULT == 0 else 128
    n_tiles = _cdiv(batch, cap)
    tb = _round_up(_cdiv(batch, n_tiles), lane_mult)
    # v7x: with grid=(1,) the second TensorCore idles; split mid/large batches into 2 tiles.
    if n_tiles == 1 and batch >= _MIN_SPLIT_B and tb >= 2 * lane_mult:
        n_tiles = 2
        tb = _round_up(_cdiv(batch, 2), lane_mult)
    return tb, n_tiles * tb


@functools.partial(jax.jit, static_argnames=("block_batch", "out_dtype"))
def feedforward_fmajor(xt, params, *, block_batch=_MAX_TB, out_dtype=jnp.float32):
    """Primary entry (no wrapper layout passes): xt (INPUT_DIM, B) -> (NUM_CLASSES, B)."""
    _, B = xt.shape
    tb, b_pad = _choose_tile(B, block_batch)
    if b_pad != B:
        # Last tile must be full: Pallas does not bounds-check VMEM refs.
        xt = jnp.pad(xt, ((0, 0), (0, b_pad - B)))

    resident = lambda i: (0, 0)  # weights/biases: same block every step -> DMA'd once, stay in VMEM
    out_t = pl.pallas_call(
        feedforward_kernel,
        out_shape=jax.ShapeDtypeStruct((NUM_CLASSES, b_pad), out_dtype),
        grid=(b_pad // tb,),
        in_specs=[
            pl.BlockSpec((INPUT_DIM, tb), lambda i: (0, i)),       # streamed x tiles
            pl.BlockSpec((HIDDEN_DIM, INPUT_DIM), resident),       # w1
            pl.BlockSpec((HIDDEN_DIM, 1), resident),               # b1
            pl.BlockSpec((HIDDEN_DIM, HIDDEN_DIM), resident),      # w2
            pl.BlockSpec((HIDDEN_DIM, 1), resident),               # b2
            pl.BlockSpec((NUM_CLASSES, HIDDEN_DIM), resident),     # w3
            pl.BlockSpec((NUM_CLASSES, 1), resident),              # b3
        ],
        out_specs=pl.BlockSpec((NUM_CLASSES, tb), lambda i: (0, i)),
        compiler_params=pltpu.CompilerParams(
            dimension_semantics=("parallel",),       # v7x: shard batch tiles over both TCs
            vmem_limit_bytes=32 * 1024 * 1024,       # >= 2x the <=16.8 MiB double-buffer budget
        ),
    )(xt, params["w1"], params["b1"], params["w2"], params["b2"],
      params["w3"], params["b3"])

    # Pad columns computed relu(b1)/relu(b2)+b3 garbage -- slice them off.
    return out_t if b_pad == B else out_t[:, :B]


@functools.partial(jax.jit, static_argnames=("block_batch", "out_dtype"))
def feedforward(x, params, *, block_batch=_MAX_TB, out_dtype=jnp.float32):
    """PyTorch-layout convenience wrapper: x (B, INPUT_DIM) -> (B, NUM_CLASSES).

    The transposes here are pure layout plumbing over HBM; producers that can supply
    feature-major activations should call feedforward_fmajor directly (per perf review).
    """
    return feedforward_fmajor(x.T, params, block_batch=block_batch, out_dtype=out_dtype).T


def init_params(key, sparsity=SPARSITY):
    """Deterministic init mimicking nn.Linear defaults + sparsity mask (PyTorch layout)."""
    sizes = [INPUT_DIM, HIDDEN_DIM, HIDDEN_DIM, NUM_CLASSES]
    params = {}
    for i in range(len(sizes) - 1):
        fan_in, fan_out = sizes[i], sizes[i + 1]
        key, kw, kb, km = jax.random.split(key, 4)
        bound = 1.0 / jnp.sqrt(fan_in)
        # nn.Linear layout: weight (out_features, in_features); bias kept as (out, 1)
        w = jax.random.uniform(kw, (fan_out, fan_in), jnp.float32, -bound, bound)
        b = jax.random.uniform(kb, (fan_out, 1), jnp.float32, -bound, bound)
        # apply_sparsity(): zero out weights where rand <= sparsity
        mask = (jax.random.uniform(km, (fan_out, fan_in)) > sparsity).astype(jnp.float32)
        params[f"w{i + 1}"] = w * mask
        params[f"b{i + 1}"] = b
    return params


def feedforward_ref(x, params):
    h1 = jnp.maximum(x @ params["w1"].T + params["b1"].T, 0.0)
    h2 = jnp.maximum(h1 @ params["w2"].T + params["b2"].T, 0.0)
    return h2 @ params["w3"].T + params["b3"].T


if __name__ == "__main__":
    key = jax.random.PRNGKey(0)
    kp, kx1, kx2, kx3 = jax.random.split(key, 4)
    params = init_params(kp)

    # Tiny batch (tail padding path) through the PyTorch-layout wrapper.
    x_small = jax.random.normal(kx1, (8, INPUT_DIM), jnp.float32)
    out_small = jax.block_until_ready(feedforward(x_small, params))
    assert out_small.shape == (8, NUM_CLASSES)
    assert jnp.allclose(out_small, feedforward_ref(x_small, params), atol=1e-5, rtol=1e-5)

    # Multi-tile pipelined grid (user tile cap 128 -> 3 tiles + tail pad), feature-major entry.
    x_mid = jax.random.normal(kx2, (INPUT_DIM, 300), jnp.float32)
    out_mid = jax.block_until_ready(feedforward_fmajor(x_mid, params, block_batch=128))
    assert out_mid.shape == (NUM_CLASSES, 300)
    assert jnp.allclose(out_mid.T, feedforward_ref(x_mid.T, params), atol=1e-5, rtol=1e-5)

    # Mid batch with default tiling: exercises the >=2-tile split (both TensorCores on v7x).
    x_big = jax.random.normal(kx3, (INPUT_DIM, 2048), jnp.float32)
    out_big = jax.block_until_ready(feedforward_fmajor(x_big, params))
    assert out_big.shape == (NUM_CLASSES, 2048)
    assert jnp.allclose(out_big.T, feedforward_ref(x_big.T, params), atol=1e-5, rtol=1e-5)

    print("KERNEL_OK")
</pallas_src>

<mosaic_0001>
module attributes {stable_mosaic.version = 11 : i64} {
  func.func @feedforward_kernel(%arg0: i32, %arg1: memref<4x512xf32, #tpu.memory_space<vmem>>, %arg2: memref<16x4xf32, #tpu.memory_space<vmem>>, %arg3: memref<16x1xf32, #tpu.memory_space<vmem>>, %arg4: memref<16x16xf32, #tpu.memory_space<vmem>>, %arg5: memref<16x1xf32, #tpu.memory_space<vmem>>, %arg6: memref<3x16xf32, #tpu.memory_space<vmem>>, %arg7: memref<3x1xf32, #tpu.memory_space<vmem>>, %arg8: memref<3x512xf32, #tpu.memory_space<vmem>>) attributes {dimension_semantics = [#tpu.dimension_semantics<parallel>], iteration_bounds = array<i64: 1>, scalar_prefetch = 0 : i64, scratch_operands = 0 : i64, tpu.core_type = #tpu.core_type<tc>, window_params = [{transform_indices = @transform_0, window_bounds = array<i64: 4, 512>}, {pipeline_mode = #tpu.pipeline_mode<synchronous>, transform_indices = @transform_1, window_bounds = array<i64: 16, 4>}, {pipeline_mode = #tpu.pipeline_mode<synchronous>, transform_indices = @transform_2, window_bounds = array<i64: 16, 1>}, {pipeline_mode = #tpu.pipeline_mode<synchronous>, transform_indices = @transform_3, window_bounds = array<i64: 16, 16>}, {pipeline_mode = #tpu.pipeline_mode<synchronous>, transform_indices = @transform_4, window_bounds = array<i64: 16, 1>}, {pipeline_mode = #tpu.pipeline_mode<synchronous>, transform_indices = @transform_5, window_bounds = array<i64: 3, 16>}, {pipeline_mode = #tpu.pipeline_mode<synchronous>, transform_indices = @transform_6, window_bounds = array<i64: 3, 1>}, {transform_indices = @transform_7, window_bounds = array<i64: 3, 512>}]} {
    %c0 = arith.constant 0 : index
    %c0_0 = arith.constant 0 : index
    %0 = vector.load %arg1[%c0, %c0_0] : memref<4x512xf32, #tpu.memory_space<vmem>>, vector<4x512xf32>
    %c0_1 = arith.constant 0 : index
    %c0_2 = arith.constant 0 : index
    %1 = vector.load %arg2[%c0_1, %c0_2] : memref<16x4xf32, #tpu.memory_space<vmem>>, vector<16x4xf32>
    %cst = arith.constant dense<0.000000e+00> : vector<16x512xf32>
    %2 = tpu.matmul %1, %0, %cst {dimension_numbers = #tpu.dot_dimension_numbers<[1], [0], [0], [1], [0, 0, 1, 1], [], []>} : vector<16x4xf32>, vector<4x512xf32>, vector<16x512xf32> -> vector<16x512xf32>
    %c0_3 = arith.constant 0 : index
    %c0_4 = arith.constant 0 : index
    %3 = vector.load %arg3[%c0_3, %c0_4] : memref<16x1xf32, #tpu.memory_space<vmem>>, vector<16x1xf32>
    %4 = vector.broadcast %3 : vector<16x1xf32> to vector<16x512xf32>
    %5 = arith.addf %2, %4 : vector<16x512xf32>
    %cst_5 = arith.constant 0.000000e+00 : f32
    %6 = vector.broadcast %cst_5 : f32 to vector<16x512xf32>
    %7 = arith.maximumf %5, %6 : vector<16x512xf32>
    %c0_6 = arith.constant 0 : index
    %c0_7 = arith.constant 0 : index
    %8 = vector.load %arg4[%c0_6, %c0_7] : memref<16x16xf32, #tpu.memory_space<vmem>>, vector<16x16xf32>
    %cst_8 = arith.constant dense<0.000000e+00> : vector<16x512xf32>
    %9 = tpu.matmul %8, %7, %cst_8 {dimension_numbers = #tpu.dot_dimension_numbers<[1], [0], [0], [1], [0, 0, 1, 1], [], []>} : vector<16x16xf32>, vector<16x512xf32>, vector<16x512xf32> -> vector<16x512xf32>
    %c0_9 = arith.constant 0 : index
    %c0_10 = arith.constant 0 : index
    %10 = vector.load %arg5[%c0_9, %c0_10] : memref<16x1xf32, #tpu.memory_space<vmem>>, vector<16x1xf32>
    %11 = vector.broadcast %10 : vector<16x1xf32> to vector<16x512xf32>
    %12 = arith.addf %9, %11 : vector<16x512xf32>
    %cst_11 = arith.constant 0.000000e+00 : f32
    %13 = vector.broadcast %cst_11 : f32 to vector<16x512xf32>
    %14 = arith.maximumf %12, %13 : vector<16x512xf32>
    %c0_12 = arith.constant 0 : index
    %c0_13 = arith.constant 0 : index
    %15 = vector.load %arg6[%c0_12, %c0_13] : memref<3x16xf32, #tpu.memory_space<vmem>>, vector<3x16xf32>
    %cst_14 = arith.constant dense<0.000000e+00> : vector<3x512xf32>
    %16 = tpu.matmul %15, %14, %cst_14 {dimension_numbers = #tpu.dot_dimension_numbers<[1], [0], [0], [1], [0, 0, 1, 1], [], []>} : vector<3x16xf32>, vector<16x512xf32>, vector<3x512xf32> -> vector<3x512xf32>
    %c0_15 = arith.constant 0 : index
    %c0_16 = arith.constant 0 : index
    %17 = vector.load %arg7[%c0_15, %c0_16] : memref<3x1xf32, #tpu.memory_space<vmem>>, vector<3x1xf32>
    %18 = vector.broadcast %17 : vector<3x1xf32> to vector<3x512xf32>
    %19 = arith.addf %16, %18 : vector<3x512xf32>
    %c0_17 = arith.constant 0 : index
    %c0_18 = arith.constant 0 : index
    %20 = vector.load %arg8[%c0_17, %c0_18] : memref<3x512xf32, #tpu.memory_space<vmem>>, vector<3x512xf32>
    tpu.vector_store %arg8[%c0_17, %c0_18], %19 {strides = array<i32>} : memref<3x512xf32, #tpu.memory_space<vmem>>, vector<3x512xf32>,
    return
  }
  func.func @transform_0(%arg0: i32) -> (i32, i32) {
    %c0_i32 = arith.constant 0 : i32
    %c0_i32_0 = arith.constant 0 : i32
    return %c0_i32, %arg0 : i32, i32
  }
  func.func @transform_1(%arg0: i32) -> (i32, i32) {
    %c0_i32 = arith.constant 0 : i32
    %c0_i32_0 = arith.constant 0 : i32
    %c0_i32_1 = arith.constant 0 : i32
    return %c0_i32, %c0_i32_0 : i32, i32
  }
  func.func @transform_2(%arg0: i32) -> (i32, i32) {
    %c0_i32 = arith.constant 0 : i32
    %c0_i32_0 = arith.constant 0 : i32
    %c0_i32_1 = arith.constant 0 : i32
    return %c0_i32, %c0_i32_0 : i32, i32
  }
  func.func @transform_3(%arg0: i32) -> (i32, i32) {
    %c0_i32 = arith.constant 0 : i32
    %c0_i32_0 = arith.constant 0 : i32
    %c0_i32_1 = arith.constant 0 : i32
    return %c0_i32, %c0_i32_0 : i32, i32
  }
  func.func @transform_4(%arg0: i32) -> (i32, i32) {
    %c0_i32 = arith.constant 0 : i32
    %c0_i32_0 = arith.constant 0 : i32
    %c0_i32_1 = arith.constant 0 : i32
    return %c0_i32, %c0_i32_0 : i32, i32
  }
  func.func @transform_5(%arg0: i32) -> (i32, i32) {
    %c0_i32 = arith.constant 0 : i32
    %c0_i32_0 = arith.constant 0 : i32
    %c0_i32_1 = arith.constant 0 : i32
    return %c0_i32, %c0_i32_0 : i32, i32
  }
  func.func @transform_6(%arg0: i32) -> (i32, i32) {
    %c0_i32 = arith.constant 0 : i32
    %c0_i32_0 = arith.constant 0 : i32
    %c0_i32_1 = arith.constant 0 : i32
    return %c0_i32, %c0_i32_0 : i32, i32
  }
  func.func @transform_7(%arg0: i32) -> (i32, i32) {
    %c0_i32 = arith.constant 0 : i32
    %c0_i32_0 = arith.constant 0 : i32
    return %c0_i32, %arg0 : i32, i32
  }
}

</mosaic_0001>

<llo_original>
// kernel: feedforward_fmajor.1
$region0: #{feedforward_fmajor.1}
  #allocation0 [shape = 'u32[]', space=smem, size = 0x4, offset = 0x4, fixed_abs, tag = 'smem constant byte address 0x4 - core index']
  #allocation1 [shape = 'u32[72,128]{1,0:T(1,128)}', space=vmem, size = 0x9000, scoped, tag = 'internal scratch']
  %s0 = inlined_call_operand.vmem [shape: f32[4,512], index: 0, kind: input, shape index: {}]
  %s1 = inlined_call_operand.vmem [shape: f32[16,4], index: 1, kind: input, shape index: {}]
  %s2 = inlined_call_operand.vmem [shape: f32[16,1], index: 2, kind: input, shape index: {}]
  %s3 = inlined_call_operand.vmem [shape: f32[16,16], index: 3, kind: input, shape index: {}]
  %s4 = inlined_call_operand.vmem [shape: f32[16,1], index: 4, kind: input, shape index: {}]
  %s5 = inlined_call_operand.vmem [shape: f32[3,16], index: 5, kind: input, shape index: {}]
  %s6 = inlined_call_operand.vmem [shape: f32[3,1], index: 6, kind: input, shape index: {}]
  %s7 = inlined_call_operand.vmem [shape: f32[3,512], index: 7, kind: output, shape index: {}]
  %s8 = sld [smem:[#allocation0]]
  $region38: #{feedforward_fmajor.1} parent=0
    _
  %s10 = ssub.s32 1, %s8
  %s11 = scalar_select 0, %s10, %s8
  // Predicated region
  $region2: #{feedforward_fmajor.1} parent=0 // pred_check
    _
  $region3: #{feedforward_fmajor.1} parent=0 // pred_check_branch
    %13 = sbr.rel (0) target = $region5
  $region4: #{feedforward_fmajor.1} parent=0 // pred_region
    _
  $region5: #{feedforward_fmajor.1} parent=0 // pred_fallthru
    _
  // Predicated region
  $region6: #{feedforward_fmajor.1} parent=0 // pred_check
    _
  $region7: #{feedforward_fmajor.1} parent=0 // pred_check_branch
    %15 = sbr.rel (0) target = $region9
  $region8: #{feedforward_fmajor.1} parent=0 // pred_region
    _
  $region9: #{feedforward_fmajor.1} parent=0 // pred_fallthru
    _
  // Predicated region
  $region10: #{feedforward_fmajor.1} parent=0 // pred_check
    _
  $region11: #{feedforward_fmajor.1} parent=0 // pred_check_branch
    %17 = sbr.rel (0) target = $region13
  $region12: #{feedforward_fmajor.1} parent=0 // pred_region
    _
  $region13: #{feedforward_fmajor.1} parent=0 // pred_fallthru
    _
  // Predicated region
  $region14: #{feedforward_fmajor.1} parent=0 // pred_check
    _
  $region15: #{feedforward_fmajor.1} parent=0 // pred_check_branch
    %19 = sbr.rel (0) target = $region17
  $region16: #{feedforward_fmajor.1} parent=0 // pred_region
    _
  $region17: #{feedforward_fmajor.1} parent=0 // pred_fallthru
    _
  // Predicated region
  $region18: #{feedforward_fmajor.1} parent=0 // pred_check
    _
  $region19: #{feedforward_fmajor.1} parent=0 // pred_check_branch
    %21 = sbr.rel (0) target = $region21
  $region20: #{feedforward_fmajor.1} parent=0 // pred_region
    _
  $region21: #{feedforward_fmajor.1} parent=0 // pred_fallthru
    _
  // Predicated region
  $region22: #{feedforward_fmajor.1} parent=0 // pred_check
    _
  $region23: #{feedforward_fmajor.1} parent=0 // pred_check_branch
    %23 = sbr.rel (0) target = $region25
  $region24: #{feedforward_fmajor.1} parent=0 // pred_region
    _
  $region25: #{feedforward_fmajor.1} parent=0 // pred_fallthru
    _
  // Predicated region
  $region26: #{feedforward_fmajor.1} parent=0 // pred_check
    _
  $region27: #{feedforward_fmajor.1} parent=0 // pred_check_branch
    %25 = sbr.rel (0) target = $region29
  $region28: #{feedforward_fmajor.1} parent=0 // pred_region
    _
  $region29: #{feedforward_fmajor.1} parent=0 // pred_fallthru
    _
  %v26 = vld [vmem:[%s0] sm:$0xff]
  %v27 = vld [vmem:[%s0 + $0x8] sm:$0xff]
  %v28 = vld [vmem:[%s1] sm:$0xff]
  %v29 = vld [vmem:[%s1 + $0x8] sm:$0xff]
  %v30 = vld [vmem:[%s2] sm:$0xff]
  %v31 = vld [vmem:[%s2 + $0x8] sm:$0xff]
  %33 = vset.pattern.permute.xlu0 0
  %34 = vperm.xlu0 %33, %v30
  %v35 = vpop.permute.xlu0 %34
  %38 = vset.pattern.permute.xlu0 0
  %39 = vperm.xlu0 %38, %v31
  %v40 = vpop.permute.xlu0 %39
  %44 = vst [vmem:[#allocation1] ss:$2 sm:$0xff] %v26
  %s45 = scalar_lea.vmem [#allocation1], 16
  %46 = vst [vmem:[%s45] ss:$2 sm:$0xff] %v27
  %v47 = vld.sshfl [vmem:[#allocation1] sm:$0xff pattern:$0x75316420]
  %v48 = vld.sshfl [vmem:[#allocation1 + $0x8] sm:$0xff pattern:$0x75316420]
  %v49 = vld.sshfl [vmem:[#allocation1 + $0x10] sm:$0xff pattern:$0x75316420]
  %v50 = vld.sshfl [vmem:[#allocation1 + $0x18] sm:$0xff pattern:$0x75316420]
  %vm51 = vcmask 31744
  %v53 = vsel %vm51, %v28, 0
  %v56 = vsel %vm51, %v29, 0
  %vm58 = vcmask 1043456
  %v59 = vsel %vm58, %v47, 0
  %v61 = vsel %vm58, %v48, 0
  %v63 = vsel %vm58, %v49, 0
  %v65 = vsel %vm58, %v50, 0
  %67 = vmatpush.msra.mxu0 0.0
  %68 = vmatpush.msra.mxu0 0.0
  %69 = vmatpush.msra.mxu0 0.0
  %70 = vmatpush.msra.mxu0 0.0
  %71 = vmatpush.msra.mxu0 0.0
  %72 = vmatpush.msra.mxu0 0.0
  %73 = vmatpush.msra.mxu0 0.0
  %74 = vmatpush.msra.mxu0 0.0
  %75 = vmatpush.msra.mxu0 0.0
  %76 = vmatpush.msra.mxu0 0.0
  %77 = vmatpush.msra.mxu0 0.0
  %78 = vmatpush.msra.mxu0 0.0
  %79 = vmatpush.msra.mxu0 0.0
  %80 = vmatpush.msra.mxu0 0.0
  %81 = vmatpush.msra.mxu0 0.0
  %82 = vmatpush.msra.mxu0 %v59
  %83 = vmatmul.f32.gmra.mxu0 %v53
  %v84 = vpop.f32.mrf.mxu0
  %v85 = vadd.f32 %v35, %v84
  %86 = vmatmul.f32.gmra.mxu0 %v56
  %v87 = vpop.f32.mrf.mxu0
  %v88 = vadd.f32 %v40, %v87
  %89 = vdwg.mxu0
  %90 = vmatpush.msra.mxu0 0.0
  %91 = vmatpush.msra.mxu0 0.0
  %92 = vmatpush.msra.mxu0 0.0
  %93 = vmatpush.msra.mxu0 0.0
  %94 = vmatpush.msra.mxu0 0.0
  %95 = vmatpush.msra.mxu0 0.0
  %96 = vmatpush.msra.mxu0 0.0
  %97 = vmatpush.msra.mxu0 0.0
  %98 = vmatpush.msra.mxu0 0.0
  %99 = vmatpush.msra.mxu0 0.0
  %100 = vmatpush.msra.mxu0 0.0
  %101 = vmatpush.msra.mxu0 0.0
  %102 = vmatpush.msra.mxu0 0.0
  %103 = vmatpush.msra.mxu0 0.0
  %104 = vmatpush.msra.mxu0 0.0
  %105 = vmatpush.msra.mxu0 %v61
  %106 = vmatmul.f32.gmra.mxu0 %v53
  %v107 = vpop.f32.mrf.mxu0
  %v108 = vadd.f32 %v35, %v107
  %109 = vmatmul.f32.gmra.mxu0 %v56
  %v110 = vpop.f32.mrf.mxu0
  %v111 = vadd.f32 %v40, %v110
  %112 = vdwg.mxu0
  %113 = vmatpush.msra.mxu0 0.0
  %114 = vmatpush.msra.mxu0 0.0
  %115 = vmatpush.msra.mxu0 0.0
  %116 = vmatpush.msra.mxu0 0.0
  %117 = vmatpush.msra.mxu0 0.0
  %118 = vmatpush.msra.mxu0 0.0
  %119 = vmatpush.msra.mxu0 0.0
  %120 = vmatpush.msra.mxu0 0.0
  %121 = vmatpush.msra.mxu0 0.0
  %122 = vmatpush.msra.mxu0 0.0
  %123 = vmatpush.msra.mxu0 0.0
  %124 = vmatpush.msra.mxu0 0.0
  %125 = vmatpush.msra.mxu0 0.0
  %126 = vmatpush.msra.mxu0 0.0
  %127 = vmatpush.msra.mxu0 0.0
  %128 = vmatpush.msra.mxu0 %v63
  %129 = vmatmul.f32.gmra.mxu0 %v53
  %v130 = vpop.f32.mrf.mxu0
  %v131 = vadd.f32 %v35, %v130
  %132 = vmatmul.f32.gmra.mxu0 %v56
  %v133 = vpop.f32.mrf.mxu0
  %v134 = vadd.f32 %v40, %v133
  %135 = vdwg.mxu0
  %136 = vmatpush.msra.mxu0 0.0
  %137 = vmatpush.msra.mxu0 0.0
  %138 = vmatpush.msra.mxu0 0.0
  %139 = vmatpush.msra.mxu0 0.0
  %140 = vmatpush.msra.mxu0 0.0
  %141 = vmatpush.msra.mxu0 0.0
  %142 = vmatpush.msra.mxu0 0.0
  %143 = vmatpush.msra.mxu0 0.0
  %144 = vmatpush.msra.mxu0 0.0
  %145 = vmatpush.msra.mxu0 0.0
  %146 = vmatpush.msra.mxu0 0.0
  %147 = vmatpush.msra.mxu0 0.0
  %148 = vmatpush.msra.mxu0 0.0
  %149 = vmatpush.msra.mxu0 0.0
  %150 = vmatpush.msra.mxu0 0.0
  %151 = vmatpush.msra.mxu0 %v65
  %152 = vmatmul.f32.gmra.mxu0 %v53
  %v153 = vpop.f32.mrf.mxu0
  %v154 = vadd.f32 %v35, %v153
  %155 = vmatmul.f32.gmra.mxu0 %v56
  %v156 = vpop.f32.mrf.mxu0
  %v157 = vadd.f32 %v40, %v156
  %158 = vdwg.mxu0
  %v159 = vmax.f32 %v85, 0.0
  %v160 = vmax.f32 %v108, 0.0
  %v161 = vmax.f32 %v131, 0.0
  %v162 = vmax.f32 %v154, 0.0
  %v163 = vmax.f32 %v88, 0.0
  %v164 = vmax.f32 %v111, 0.0
  %v165 = vmax.f32 %v134, 0.0
  %v166 = vmax.f32 %v157, 0.0
  %v167 = vld [vmem:[%s3] sm:$0xff]
  %v168 = vld [vmem:[%s3 + $0x8] sm:$0xff]
  %v169 = vld [vmem:[%s4] sm:$0xff]
  %v170 = vld [vmem:[%s4 + $0x8] sm:$0xff]
  %172 = vset.pattern.permute.xlu0 0
  %173 = vperm.xlu0 %172, %v169
  %v174 = vpop.permute.xlu0 %173
  %177 = vset.pattern.permute.xlu0 0
  %178 = vperm.xlu0 %177, %v170
  %v179 = vpop.permute.xlu0 %178
  %vm181 = vcmask 130048
  %v183 = vsel %vm181, %v167, 0
  %v186 = vsel %vm181, %v168, 0
  %188 = vmatpush.msra.mxu0 0.0
  %189 = vmatpush.msra.mxu0 0.0
  %190 = vmatpush.msra.mxu0 0.0
  %191 = vmatpush.msra.mxu0 0.0
  %192 = vmatpush.msra.mxu0 0.0
  %193 = vmatpush.msra.mxu0 0.0
  %194 = vmatpush.msra.mxu0 0.0
  %195 = vmatpush.msra.mxu0 0.0
  %196 = vmatpush.msra.mxu0 0.0
  %197 = vmatpush.msra.mxu0 0.0
  %198 = vmatpush.msra.mxu0 0.0
  %199 = vmatpush.msra.mxu0 0.0
  %200 = vmatpush.msra.mxu0 0.0
  %201 = vmatpush.msra.mxu0 0.0
  %202 = vmatpush.msra.mxu0 %v163
  %203 = vmatpush.msra.mxu0 %v159
  %204 = vmatmul.f32.gmra.mxu0 %v183
  %v205 = vpop.f32.mrf.mxu0
  %v206 = vadd.f32 %v174, %v205
  %207 = vmatmul.f32.gmra.mxu0 %v186
  %v208 = vpop.f32.mrf.mxu0
  %v209 = vadd.f32 %v179, %v208
  %210 = vdwg.mxu0
  %211 = vmatpush.msra.mxu0 0.0
  %212 = vmatpush.msra.mxu0 0.0
  %213 = vmatpush.msra.mxu0 0.0
  %214 = vmatpush.msra.mxu0 0.0
  %215 = vmatpush.msra.mxu0 0.0
  %216 = vmatpush.msra.mxu0 0.0
  %217 = vmatpush.msra.mxu0 0.0
  %218 = vmatpush.msra.mxu0 0.0
  %219 = vmatpush.msra.mxu0 0.0
  %220 = vmatpush.msra.mxu0 0.0
  %221 = vmatpush.msra.mxu0 0.0
  %222 = vmatpush.msra.mxu0 0.0
  %223 = vmatpush.msra.mxu0 0.0
  %224 = vmatpush.msra.mxu0 0.0
  %225 = vmatpush.msra.mxu0 %v164
  %226 = vmatpush.msra.mxu0 %v160
  %227 = vmatmul.f32.gmra.mxu0 %v183
  %v228 = vpop.f32.mrf.mxu0
  %v229 = vadd.f32 %v174, %v228
  %230 = vmatmul.f32.gmra.mxu0 %v186
  %v231 = vpop.f32.mrf.mxu0
  %v232 = vadd.f32 %v179, %v231
  %233 = vdwg.mxu0
  %234 = vmatpush.msra.mxu0 0.0
  %235 = vmatpush.msra.mxu0 0.0
  %236 = vmatpush.msra.mxu0 0.0
  %237 = vmatpush.msra.mxu0 0.0
  %238 = vmatpush.msra.mxu0 0.0
  %239 = vmatpush.msra.mxu0 0.0
  %240 = vmatpush.msra.mxu0 0.0
  %241 = vmatpush.msra.mxu0 0.0
  %242 = vmatpush.msra.mxu0 0.0
  %243 = vmatpush.msra.mxu0 0.0
  %244 = vmatpush.msra.mxu0 0.0
  %245 = vmatpush.msra.mxu0 0.0
  %246 = vmatpush.msra.mxu0 0.0
  %247 = vmatpush.msra.mxu0 0.0
  %248 = vmatpush.msra.mxu0 %v165
  %249 = vmatpush.msra.mxu0 %v161
  %250 = vmatmul.f32.gmra.mxu0 %v183
  %v251 = vpop.f32.mrf.mxu0
  %v252 = vadd.f32 %v174, %v251
  %253 = vmatmul.f32.gmra.mxu0 %v186
  %v254 = vpop.f32.mrf.mxu0
  %v255 = vadd.f32 %v179, %v254
  %256 = vdwg.mxu0
  %257 = vmatpush.msra.mxu0 0.0
  %258 = vmatpush.msra.mxu0 0.0
  %259 = vmatpush.msra.mxu0 0.0
  %260 = vmatpush.msra.mxu0 0.0
  %261 = vmatpush.msra.mxu0 0.0
  %262 = vmatpush.msra.mxu0 0.0
  %263 = vmatpush.msra.mxu0 0.0
  %264 = vmatpush.msra.mxu0 0.0
  %265 = vmatpush.msra.mxu0 0.0
  %266 = vmatpush.msra.mxu0 0.0
  %267 = vmatpush.msra.mxu0 0.0
  %268 = vmatpush.msra.mxu0 0.0
  %269 = vmatpush.msra.mxu0 0.0
  %270 = vmatpush.msra.mxu0 0.0
  %271 = vmatpush.msra.mxu0 %v166
  %272 = vmatpush.msra.mxu0 %v162
  %273 = vmatmul.f32.gmra.mxu0 %v183
  %v274 = vpop.f32.mrf.mxu0
  %v275 = vadd.f32 %v174, %v274
  %276 = vmatmul.f32.gmra.mxu0 %v186
  %v277 = vpop.f32.mrf.mxu0
  %v278 = vadd.f32 %v179, %v277
  %279 = vdwg.mxu0
  %v280 = vmax.f32 %v206, 0.0
  %v281 = vmax.f32 %v229, 0.0
  %v282 = vmax.f32 %v252, 0.0
  %v283 = vmax.f32 %v275, 0.0
  %v284 = vmax.f32 %v209, 0.0
  %v285 = vmax.f32 %v232, 0.0
  %v286 = vmax.f32 %v255, 0.0
  %v287 = vmax.f32 %v278, 0.0
  %v288 = vld [vmem:[%s5] sm:$0x7]
  %v289 = vld [vmem:[%s6] sm:$0x7]
  %291 = vset.pattern.permute.xlu0 0
  %292 = vperm.xlu0 %291, %v289
  %v293 = vpop.permute.xlu0 %292
  %v296 = vsel %vm181, %v288, 0
  %298 = vmatpush.msra.mxu0 0.0
  %299 = vmatpush.msra.mxu0 0.0
  %300 = vmatpush.msra.mxu0 0.0
  %301 = vmatpush.msra.mxu0 0.0
  %302 = vmatpush.msra.mxu0 0.0
  %303 = vmatpush.msra.mxu0 0.0
  %304 = vmatpush.msra.mxu0 0.0
  %305 = vmatpush.msra.mxu0 0.0
  %306 = vmatpush.msra.mxu0 0.0
  %307 = vmatpush.msra.mxu0 0.0
  %308 = vmatpush.msra.mxu0 0.0
  %309 = vmatpush.msra.mxu0 0.0
  %310 = vmatpush.msra.mxu0 0.0
  %311 = vmatpush.msra.mxu0 0.0
  %312 = vmatpush.msra.mxu0 %v284
  %313 = vmatpush.msra.mxu0 %v280
  %314 = vmatmul.f32.gmra.mxu0 %v296
  %v315 = vpop.f32.mrf.mxu0
  %v316 = vadd.f32 %v293, %v315
  %317 = vdwg.mxu0
  %318 = vmatpush.msra.mxu0 0.0
  %319 = vmatpush.msra.mxu0 0.0
  %320 = vmatpush.msra.mxu0 0.0
  %321 = vmatpush.msra.mxu0 0.0
  %322 = vmatpush.msra.mxu0 0.0
  %323 = vmatpush.msra.mxu0 0.0
  %324 = vmatpush.msra.mxu0 0.0
  %325 = vmatpush.msra.mxu0 0.0
  %326 = vmatpush.msra.mxu0 0.0
  %327 = vmatpush.msra.mxu0 0.0
  %328 = vmatpush.msra.mxu0 0.0
  %329 = vmatpush.msra.mxu0 0.0
  %330 = vmatpush.msra.mxu0 0.0
  %331 = vmatpush.msra.mxu0 0.0
  %332 = vmatpush.msra.mxu0 %v285
  %333 = vmatpush.msra.mxu0 %v281
  %334 = vmatmul.f32.gmra.mxu0 %v296
  %v335 = vpop.f32.mrf.mxu0
  %v336 = vadd.f32 %v293, %v335
  %337 = vdwg.mxu0
  %338 = vmatpush.msra.mxu0 0.0
  %339 = vmatpush.msra.mxu0 0.0
  %340 = vmatpush.msra.mxu0 0.0
  %341 = vmatpush.msra.mxu0 0.0
  %342 = vmatpush.msra.mxu0 0.0
  %343 = vmatpush.msra.mxu0 0.0
  %344 = vmatpush.msra.mxu0 0.0
  %345 = vmatpush.msra.mxu0 0.0
  %346 = vmatpush.msra.mxu0 0.0
  %347 = vmatpush.msra.mxu0 0.0
  %348 = vmatpush.msra.mxu0 0.0
  %349 = vmatpush.msra.mxu0 0.0
  %350 = vmatpush.msra.mxu0 0.0
  %351 = vmatpush.msra.mxu0 0.0
  %352 = vmatpush.msra.mxu0 %v286
  %353 = vmatpush.msra.mxu0 %v282
  %354 = vmatmul.f32.gmra.mxu0 %v296
  %v355 = vpop.f32.mrf.mxu0
  %v356 = vadd.f32 %v293, %v355
  %357 = vdwg.mxu0
  %358 = vmatpush.msra.mxu0 0.0
  %359 = vmatpush.msra.mxu0 0.0
  %360 = vmatpush.msra.mxu0 0.0
  %361 = vmatpush.msra.mxu0 0.0
  %362 = vmatpush.msra.mxu0 0.0
  %363 = vmatpush.msra.mxu0 0.0
  %364 = vmatpush.msra.mxu0 0.0
  %365 = vmatpush.msra.mxu0 0.0
  %366 = vmatpush.msra.mxu0 0.0
  %367 = vmatpush.msra.mxu0 0.0
  %368 = vmatpush.msra.mxu0 0.0
  %369 = vmatpush.msra.mxu0 0.0
  %370 = vmatpush.msra.mxu0 0.0
  %371 = vmatpush.msra.mxu0 0.0
  %372 = vmatpush.msra.mxu0 %v287
  %373 = vmatpush.msra.mxu0 %v283
  %374 = vmatmul.f32.gmra.mxu0 %v296
  %v375 = vpop.f32.mrf.mxu0
  %v376 = vadd.f32 %v293, %v375
  %377 = vdwg.mxu0
  %v382 = vrot.slane %v336, 4
  %v383 = vrot.slane %v376, 4
  %v384 = vsel %vm58, %v316, %v382
  %v385 = vsel %vm58, %v356, %v383
  %388 = vst [vmem:[%s7] sm:$0x77] %v384
  %389 = vst [vmem:[%s7 + $0x8] sm:$0x77] %v385
  // Predicated region
  $region30: #{feedforward_fmajor.1} parent=0 // pred_check
    _
  $region31: #{feedforward_fmajor.1} parent=0 // pred_check_branch
    %391 = sbr.rel (0) target = $region33
  $region32: #{feedforward_fmajor.1} parent=0 // pred_region
    _
  $region33: #{feedforward_fmajor.1} parent=0 // pred_fallthru
    _
  // Predicated region
  $region34: #{feedforward_fmajor.1} parent=0 // pred_check
    _
  $region35: #{feedforward_fmajor.1} parent=0 // pred_check_branch
    %393 = sbr.rel (0) target = $region37
  $region36: #{feedforward_fmajor.1} parent=0 // pred_region
    _
  $region37: #{feedforward_fmajor.1} parent=0 // pred_fallthru
    _

</llo_original>
